<compile_context>
chip_gen: v7x
topology: tpu7x:2x2x1
jax: 0.10.0
libtpu: 0.0.40
codegen_flags: <defaults>
</compile_context>

<pallas_src>
import functools

import numpy as np
import jax
import jax.numpy as jnp
from jax import lax
from jax.experimental import pallas as pl
from jax.experimental.pallas import tpu as pltpu


# ----------------------------------------------------------------------------
# Fused Pallas kernel
# ----------------------------------------------------------------------------
def _bernpool_fused_kernel(x_ref, ref_ref, lw_ref, lb_ref,
                           ax_ref, w_ref, c_ref, gumbel_ref,
                           mask_ref, pool_ref, kl_ref, ortho_ref,
                           *, hard, temperature, ratio):
    n = x_ref.shape[0]
    x = x_ref[...].astype(jnp.float32)                              # [N, C]
    r = ref_ref[...].astype(jnp.float32)                            # [R, C]

    # --- cosine similarity, computed transposed so the score is lane-dense ---
    x_norm = jnp.sqrt(jnp.sum(x * x, axis=1, keepdims=True))        # [N, 1]
    r_norm = jnp.sqrt(jnp.sum(r * r, axis=1, keepdims=True))        # [R, 1]
    xn = x / (x_norm + 1e-8)
    rn = r / (r_norm + 1e-8)
    sim_t = lax.dot_general(rn, xn, (((1,), (1,)), ((), ())),
                            preferred_element_type=jnp.float32)     # [R, N]
    logits = jnp.dot(lw_ref[...].astype(jnp.float32), sim_t,
                     preferred_element_type=jnp.float32) + lb_ref[0, 0]  # [1, N]
    score = jax.nn.sigmoid(logits)                                   # [1, N]

    # --- KL( mean(score) || ratio ) ; clamp so log never sees exactly 0 / 1 ---
    prob = jnp.sum(score, keepdims=True) * (1.0 / n)                 # [1, 1]
    prob = jnp.clip(prob, 1e-6, 1.0 - 1e-6)
    kl_ref[...] = (prob * jnp.log(prob / ratio)
                   + (1.0 - prob) * jnp.log((1.0 - prob) / (1.0 - ratio)))

    # --- Gumbel-softmax over {keep, drop} (noise pre-sampled, lane-dense) -----
    g = gumbel_ref[...].astype(jnp.float32)                          # [2, N]
    l_keep = score + g[0:1, :]
    l_drop = (1.0 - score) + g[1:2, :]
    if hard:
        mask_ref[...] = (l_keep >= l_drop).astype(jnp.float32)       # argmax one-hot[:,0]
    else:
        mask_ref[...] = jax.nn.sigmoid((l_keep - l_drop) * (1.0 / temperature))

    # --- pooled features for ALL rows: relu((x + A@x) @ W); row gather commutes
    h = x + ax_ref[...].astype(jnp.float32)
    pool_ref[...] = jnp.maximum(
        jnp.dot(h, w_ref[...].astype(jnp.float32),
                preferred_element_type=jnp.float32), 0.0)

    # --- orthogonality loss || ref @ ref.T - c*I ||_F -------------------------
    gram = lax.dot_general(r, r, (((1,), (1,)), ((), ())),
                           preferred_element_type=jnp.float32)       # [R, R]
    nr = r.shape[0]
    row_i = lax.broadcasted_iota(jnp.int32, (nr, nr), 0)
    col_i = lax.broadcasted_iota(jnp.int32, (nr, nr), 1)
    eye = (row_i == col_i).astype(jnp.float32)
    m = gram - c_ref[0, 0] * eye
    ortho_ref[...] = jnp.sqrt(jnp.sum(m * m, keepdims=True))


def _smem_spec():
    return pl.BlockSpec(memory_space=pltpu.MemorySpace.SMEM)


def bernpool_fused(x, ref, lin_w, lin_b, ax, weight, c_param, gumbel, *,
                   hard, temperature, ratio):
    """Single fused pallas_call for score+sampling, pooling and both losses."""
    n, ch = x.shape
    r = ref.shape[0]
    kernel = functools.partial(_bernpool_fused_kernel, hard=bool(hard),
                               temperature=float(temperature),
                               ratio=float(ratio))
    return pl.pallas_call(
        kernel,
        out_shape=(
            jax.ShapeDtypeStruct((1, n), jnp.float32),    # bern mask (lane-dense)
            jax.ShapeDtypeStruct((n, ch), jnp.float32),   # pooled features, all rows
            jax.ShapeDtypeStruct((1, 1), jnp.float32),    # kl loss
            jax.ShapeDtypeStruct((1, 1), jnp.float32),    # ortho loss
        ),
        grid=(1,),
        in_specs=[
            pl.BlockSpec((n, ch), lambda i: (0, 0)),       # x
            pl.BlockSpec((r, ch), lambda i: (0, 0)),       # ref points
            pl.BlockSpec((1, r), lambda i: (0, 0)),        # lin1 weight
            _smem_spec(),                                  # lin1 bias  (SMEM)
            pl.BlockSpec((n, ch), lambda i: (0, 0)),       # A @ x (sparse SpMM result)
            pl.BlockSpec((ch, ch), lambda i: (0, 0)),      # pooling weight
            _smem_spec(),                                  # c          (SMEM)
            pl.BlockSpec((2, n), lambda i: (0, 0)),        # pre-sampled Gumbel noise
        ],
        out_specs=(
            pl.BlockSpec((1, n), lambda i: (0, 0)),
            pl.BlockSpec((n, ch), lambda i: (0, 0)),
            pl.BlockSpec((1, 1), lambda i: (0, 0)),
            pl.BlockSpec((1, 1), lambda i: (0, 0)),
        ),
        compiler_params=pltpu.CompilerParams(
            dimension_semantics=("arbitrary",)),
    )(x, ref, lin_w, lin_b, ax, weight, c_param, gumbel)


# ----------------------------------------------------------------------------
# Glue: sparse GCN aggregation (device) + dynamic-shape bookkeeping (host)
# ----------------------------------------------------------------------------
def gcn_norm(edge_index, num_nodes):
    """GCN.norm with unit edge weights (per-edge normalized coefficients)."""
    row, col = edge_index[0], edge_index[1]
    ew = jnp.ones((edge_index.shape[1],), jnp.float32)
    deg = jnp.zeros((num_nodes,), jnp.float32).at[row].add(ew)
    dis = jnp.power(deg, -0.5)
    dis = jnp.where(jnp.isinf(dis), 0.0, dis)
    return dis[row] * ew * dis[col]


def spmm_ax(edge_index, norm, x):
    """(A @ x) with A the normalized adjacency, built sparsely — no dense [N,N]."""
    row, col = edge_index[0], edge_index[1]
    msgs = norm[:, None] * x[col]                    # [E, C]
    return jnp.zeros_like(x).at[row].add(msgs)       # [N, C]


def filter_adj(edge_index, edge_attr, mask_index, num_nodes):
    """Keep edges with both endpoints kept; relabel node indices (host side)."""
    ei = np.asarray(edge_index)
    mask = np.zeros(num_nodes, dtype=bool)
    mask[np.asarray(mask_index)] = True
    keep = mask[ei[0]] & mask[ei[1]]
    new_idx = -np.ones(num_nodes, dtype=np.int32)
    new_idx[np.asarray(mask_index)] = np.arange(len(mask_index), dtype=np.int32)
    new_ei = np.stack([new_idx[ei[0][keep]], new_idx[ei[1][keep]]])
    new_ea = None if edge_attr is None else np.asarray(edge_attr)[keep]
    return (jnp.asarray(new_ei),
            None if new_ea is None else jnp.asarray(new_ea))


# ----------------------------------------------------------------------------
# BernPool module (parameters initialized deterministically in-script)
# ----------------------------------------------------------------------------
class BernPoolPallas:
    def __init__(self, in_channels, n_refpoint, pool_ratio, key):
        self.in_channels = in_channels
        self.ratio = float(pool_ratio)
        k_ref, k_lw, k_lb, k_w = jax.random.split(key, 4)

        # ref: orthogonal init [R, C] (rows orthonormal for R <= C)
        a = jax.random.normal(k_ref, (in_channels, n_refpoint), jnp.float32)
        q, _ = jnp.linalg.qr(a)                        # [C, R] orthonormal cols
        self.ref = jnp.transpose(q)[:n_refpoint, :]    # [R, C]

        # c: scalar parameter == 1.0 (stored as [1,1] for the SMEM scalar path)
        self.c = jnp.ones((1, 1), jnp.float32)

        # lin1: Linear(n_refpoint -> 1): weight [1, R], bias [1, 1]
        bound = 1.0 / np.sqrt(n_refpoint)
        self.lin_w = jax.random.uniform(k_lw, (1, n_refpoint), jnp.float32,
                                        -bound, bound)
        self.lin_b = jax.random.uniform(k_lb, (1, 1), jnp.float32, -bound, bound)

        # weight: [C, C], xavier normal
        std = np.sqrt(2.0 / (in_channels + in_channels))
        self.weight = std * jax.random.normal(k_w, (in_channels, in_channels),
                                              jnp.float32)

    def __call__(self, x, edge_index, edge_attr, batch, hard, key):
        n = x.shape[0]

        # --- sparse GCN aggregation A @ x (device, O(E) not O(N^2)) ----------
        norm = gcn_norm(edge_index, n)
        ax = spmm_ax(edge_index, norm, x)

        # --- Gumbel noise drawn with jax.random (lane-dense [2, N]) ----------
        gumbel = jax.random.gumbel(key, (2, n), jnp.float32)

        # --- one fused Pallas launch: score + Gumbel mask + pool + losses ----
        bern_mask_2d, pool_full, kl_2d, ortho_2d = bernpool_fused(
            x, self.ref, self.lin_w, self.lin_b, ax, self.weight, self.c,
            gumbel, hard=hard, temperature=0.5, ratio=self.ratio)

        # --- dynamic-shape bookkeeping (host). The fused kernel above is
        #     already in flight, so the device work overlaps this sync. -------
        # TODO(synk): dynamic nonzero / deleted-graph repair / edge relabeling
        #             have no static-shape Pallas equivalent; kept on host.
        bern_np = np.asarray(bern_mask_2d[0]).copy()
        batch_np = np.asarray(batch)
        kept_graphs = np.unique(batch_np[bern_np != 0])
        missing = np.setdiff1d(np.unique(batch_np), kept_graphs)
        for g in missing:
            bern_np[batch_np == g] = 1.0
        mask_index = np.nonzero(bern_np)[0]
        pool_batch = jnp.asarray(batch_np[mask_index])

        # relu((x[mask] + A[mask] @ x) @ W) == relu((x + A @ x) @ W)[mask]
        pool_x = pool_full[jnp.asarray(mask_index)]

        pool_edge_index, pool_edge_attr = filter_adj(edge_index, edge_attr,
                                                     mask_index, n)

        kl_loss = kl_2d[0, 0]
        ref_loss = ortho_2d[0, 0]
        return pool_x, pool_edge_index, pool_edge_attr, pool_batch, kl_loss, ref_loss


# ----------------------------------------------------------------------------
# Example run
# ----------------------------------------------------------------------------
if __name__ == "__main__":
    N, C, R = 16, 8, 4            # nodes, in_channels, n_refpoint
    pool_ratio = 0.5

    key = jax.random.PRNGKey(0)
    k_param, k_x, k_gumbel = jax.random.split(key, 3)

    module = BernPoolPallas(in_channels=C, n_refpoint=R,
                            pool_ratio=pool_ratio, key=k_param)

    # two graphs of 8 nodes each, bidirectional ring edges within each graph
    x = jax.random.normal(k_x, (N, C), jnp.float32)
    edges = []
    for g in range(2):
        off = g * 8
        for i in range(8):
            src, dst = off + i, off + (i + 1) % 8
            edges.append((src, dst))
            edges.append((dst, src))
    edge_index = jnp.asarray(np.array(edges, dtype=np.int32).T)       # [2, 32]
    edge_attr = None
    batch = jnp.asarray(np.repeat(np.arange(2, dtype=np.int32), 8))   # [16]

    outs = module(x, edge_index, edge_attr, batch, hard=True, key=k_gumbel)
    pool_x, pool_edge_index, pool_edge_attr, pool_batch, kl_loss, ref_loss = outs

    jax.block_until_ready(pool_x)
    jax.block_until_ready(pool_batch)
    jax.block_until_ready(kl_loss)
    jax.block_until_ready(ref_loss)

    print("KERNEL_OK")
</pallas_src>

<mosaic_0001>
module attributes {stable_mosaic.version = 11 : i64} {
  func.func @_bernpool_fused_kernel(%arg0: i32, %arg1: memref<16x8xf32, #tpu.memory_space<vmem>>, %arg2: memref<4x8xf32, #tpu.memory_space<vmem>>, %arg3: memref<1x4xf32, #tpu.memory_space<vmem>>, %arg4: memref<1x1xf32, #tpu.memory_space<smem>>, %arg5: memref<16x8xf32, #tpu.memory_space<vmem>>, %arg6: memref<8x8xf32, #tpu.memory_space<vmem>>, %arg7: memref<1x1xf32, #tpu.memory_space<smem>>, %arg8: memref<2x16xf32, #tpu.memory_space<vmem>>, %arg9: memref<1x16xf32, #tpu.memory_space<vmem>>, %arg10: memref<16x8xf32, #tpu.memory_space<vmem>>, %arg11: memref<1x1xf32, #tpu.memory_space<vmem>>, %arg12: memref<1x1xf32, #tpu.memory_space<vmem>>) attributes {dimension_semantics = [#tpu.dimension_semantics<arbitrary>], iteration_bounds = array<i64: 1>, scalar_prefetch = 0 : i64, scratch_operands = 0 : i64, tpu.core_type = #tpu.core_type<tc>, window_params = [{pipeline_mode = #tpu.pipeline_mode<synchronous>, transform_indices = @transform_0, window_bounds = array<i64: 16, 8>}, {pipeline_mode = #tpu.pipeline_mode<synchronous>, transform_indices = @transform_1, window_bounds = array<i64: 4, 8>}, {pipeline_mode = #tpu.pipeline_mode<synchronous>, transform_indices = @transform_2, window_bounds = array<i64: 1, 4>}, {transform_indices = @transform_3, window_bounds = array<i64: 1, 1>}, {pipeline_mode = #tpu.pipeline_mode<synchronous>, transform_indices = @transform_4, window_bounds = array<i64: 16, 8>}, {pipeline_mode = #tpu.pipeline_mode<synchronous>, transform_indices = @transform_5, window_bounds = array<i64: 8, 8>}, {transform_indices = @transform_6, window_bounds = array<i64: 1, 1>}, {pipeline_mode = #tpu.pipeline_mode<synchronous>, transform_indices = @transform_7, window_bounds = array<i64: 2, 16>}, {pipeline_mode = #tpu.pipeline_mode<synchronous>, transform_indices = @transform_8, window_bounds = array<i64: 1, 16>}, {pipeline_mode = #tpu.pipeline_mode<synchronous>, transform_indices = @transform_9, window_bounds = array<i64: 16, 8>}, {pipeline_mode = #tpu.pipeline_mode<synchronous>, transform_indices = @transform_10, window_bounds = array<i64: 1, 1>}, {pipeline_mode = #tpu.pipeline_mode<synchronous>, transform_indices = @transform_11, window_bounds = array<i64: 1, 1>}]} {
    %c0 = arith.constant 0 : index
    %c0_0 = arith.constant 0 : index
    %0 = vector.load %arg1[%c0, %c0_0] : memref<16x8xf32, #tpu.memory_space<vmem>>, vector<16x8xf32>
    %c0_1 = arith.constant 0 : index
    %c0_2 = arith.constant 0 : index
    %1 = vector.load %arg2[%c0_1, %c0_2] : memref<4x8xf32, #tpu.memory_space<vmem>>, vector<4x8xf32>
    %2 = arith.mulf %0, %0 : vector<16x8xf32>
    %cst = arith.constant dense<0.000000e+00> : vector<16xf32>
    %3 = vector.multi_reduction <add>, %2, %cst [1] : vector<16x8xf32> to vector<16xf32>
    %4 = vector.shape_cast %3 : vector<16xf32> to vector<16x1xf32>
    %5 = math.sqrt %4 : vector<16x1xf32>
    %6 = arith.mulf %1, %1 : vector<4x8xf32>
    %cst_3 = arith.constant dense<0.000000e+00> : vector<4xf32>
    %7 = vector.multi_reduction <add>, %6, %cst_3 [1] : vector<4x8xf32> to vector<4xf32>
    %8 = vector.shape_cast %7 : vector<4xf32> to vector<4x1xf32>
    %9 = math.sqrt %8 : vector<4x1xf32>
    %cst_4 = arith.constant 9.99999993E-9 : f32
    %10 = vector.broadcast %cst_4 : f32 to vector<16x1xf32>
    %11 = arith.addf %5, %10 : vector<16x1xf32>
    %12 = vector.broadcast %11 : vector<16x1xf32> to vector<16x8xf32>
    %13 = arith.divf %0, %12 : vector<16x8xf32>
    %cst_5 = arith.constant 9.99999993E-9 : f32
    %14 = vector.broadcast %cst_5 : f32 to vector<4x1xf32>
    %15 = arith.addf %9, %14 : vector<4x1xf32>
    %16 = vector.broadcast %15 : vector<4x1xf32> to vector<4x8xf32>
    %17 = arith.divf %1, %16 : vector<4x8xf32>
    %cst_6 = arith.constant dense<0.000000e+00> : vector<4x16xf32>
    %18 = tpu.matmul %17, %13, %cst_6 {dimension_numbers = #tpu.dot_dimension_numbers<[1], [1], [0], [0], [0, 0, 1, 0], [], []>} : vector<4x8xf32>, vector<16x8xf32>, vector<4x16xf32> -> vector<4x16xf32>
    %c0_7 = arith.constant 0 : index
    %c0_8 = arith.constant 0 : index
    %19 = vector.load %arg3[%c0_7, %c0_8] : memref<1x4xf32, #tpu.memory_space<vmem>>, vector<1x4xf32>
    %cst_9 = arith.constant dense<0.000000e+00> : vector<1x16xf32>
    %20 = tpu.matmul %19, %18, %cst_9 {dimension_numbers = #tpu.dot_dimension_numbers<[1], [0], [0], [1], [0, 0, 1, 1], [], []>} : vector<1x4xf32>, vector<4x16xf32>, vector<1x16xf32> -> vector<1x16xf32>
    %c0_10 = arith.constant 0 : index
    %c0_11 = arith.constant 0 : index
    %21 = memref.load %arg4[%c0_10, %c0_11] : memref<1x1xf32, #tpu.memory_space<smem>>
    %22 = vector.broadcast %21 : f32 to vector<1x16xf32>
    %23 = arith.addf %20, %22 : vector<1x16xf32>
    %24 = arith.negf %23 : vector<1x16xf32>
    %25 = math.exp %24 : vector<1x16xf32>
    %cst_12 = arith.constant 1.000000e+00 : f32
    %26 = vector.broadcast %cst_12 : f32 to vector<1x16xf32>
    %27 = arith.addf %26, %25 : vector<1x16xf32>
    %28 = arith.divf %26, %27 : vector<1x16xf32>
    %29 = vector.shape_cast %28 : vector<1x16xf32> to vector<1x1x16xf32>
    %cst_13 = arith.constant dense<0.000000e+00> : vector<1xf32>
    %30 = vector.multi_reduction <add>, %29, %cst_13 [1, 2] : vector<1x1x16xf32> to vector<1xf32>
    %31 = vector.shape_cast %30 : vector<1xf32> to vector<1x1x1xf32>
    %32 = vector.extract %31[0, 0, 0] : f32 from vector<1x1x1xf32>
    %33 = vector.broadcast %32 : f32 to vector<1x1xf32>
    %cst_14 = arith.constant 6.250000e-02 : f32
    %34 = vector.broadcast %cst_14 : f32 to vector<1x1xf32>
    %35 = arith.mulf %33, %34 : vector<1x1xf32>
    %cst_15 = arith.constant 9.99999997E-7 : f32
    %cst_16 = arith.constant 0.999998986 : f32
    %36 = vector.broadcast %cst_15 : f32 to vector<1x1xf32>
    %37 = arith.maximumf %36, %35 : vector<1x1xf32>
    %38 = vector.broadcast %cst_16 : f32 to vector<1x1xf32>
    %39 = arith.minimumf %38, %37 : vector<1x1xf32>
    %cst_17 = arith.constant 5.000000e-01 : f32
    %40 = vector.broadcast %cst_17 : f32 to vector<1x1xf32>
    %41 = arith.divf %39, %40 : vector<1x1xf32>
    %42 = math.log %41 : vector<1x1xf32>
    %43 = arith.mulf %39, %42 : vector<1x1xf32>
    %cst_18 = arith.constant 1.000000e+00 : f32
    %44 = vector.broadcast %cst_18 : f32 to vector<1x1xf32>
    %45 = arith.subf %44, %39 : vector<1x1xf32>
    %cst_19 = arith.constant 1.000000e+00 : f32
    %46 = vector.broadcast %cst_19 : f32 to vector<1x1xf32>
    %47 = arith.subf %46, %39 : vector<1x1xf32>
    %cst_20 = arith.constant 5.000000e-01 : f32
    %48 = vector.broadcast %cst_20 : f32 to vector<1x1xf32>
    %49 = arith.divf %47, %48 : vector<1x1xf32>
    %50 = math.log %49 : vector<1x1xf32>
    %51 = arith.mulf %45, %50 : vector<1x1xf32>
    %52 = arith.addf %43, %51 : vector<1x1xf32>
    %c0_21 = arith.constant 0 : index
    %c0_22 = arith.constant 0 : index
    %53 = vector.load %arg11[%c0_21, %c0_22] : memref<1x1xf32, #tpu.memory_space<vmem>>, vector<1x1xf32>
    tpu.vector_store %arg11[%c0_21, %c0_22], %52 {strides = array<i32>} : memref<1x1xf32, #tpu.memory_space<vmem>>, vector<1x1xf32>,
    %c0_23 = arith.constant 0 : index
    %c0_24 = arith.constant 0 : index
    %54 = vector.load %arg8[%c0_23, %c0_24] : memref<2x16xf32, #tpu.memory_space<vmem>>, vector<2x16xf32>
    %55 = vector.extract_strided_slice %54 {offsets = [0, 0], sizes = [1, 16], strides = [1, 1]} : vector<2x16xf32> to vector<1x16xf32>
    %56 = arith.addf %28, %55 : vector<1x16xf32>
    %cst_25 = arith.constant 1.000000e+00 : f32
    %57 = vector.broadcast %cst_25 : f32 to vector<1x16xf32>
    %58 = arith.subf %57, %28 : vector<1x16xf32>
    %59 = vector.extract_strided_slice %54 {offsets = [1, 0], sizes = [1, 16], strides = [1, 1]} : vector<2x16xf32> to vector<1x16xf32>
    %60 = arith.addf %58, %59 : vector<1x16xf32>
    %61 = arith.cmpf oge, %56, %60 : vector<1x16xf32>
    %62 = arith.extui %61 : vector<1x16xi1> to vector<1x16xi32>
    %63 = arith.sitofp %62 : vector<1x16xi32> to vector<1x16xf32>
    %c0_26 = arith.constant 0 : index
    %c0_27 = arith.constant 0 : index
    %64 = vector.load %arg9[%c0_26, %c0_27] : memref<1x16xf32, #tpu.memory_space<vmem>>, vector<1x16xf32>
    tpu.vector_store %arg9[%c0_26, %c0_27], %63 {strides = array<i32>} : memref<1x16xf32, #tpu.memory_space<vmem>>, vector<1x16xf32>,
    %c0_28 = arith.constant 0 : index
    %c0_29 = arith.constant 0 : index
    %65 = vector.load %arg5[%c0_28, %c0_29] : memref<16x8xf32, #tpu.memory_space<vmem>>, vector<16x8xf32>
    %66 = arith.addf %0, %65 : vector<16x8xf32>
    %c0_30 = arith.constant 0 : index
    %c0_31 = arith.constant 0 : index
    %67 = vector.load %arg6[%c0_30, %c0_31] : memref<8x8xf32, #tpu.memory_space<vmem>>, vector<8x8xf32>
    %cst_32 = arith.constant dense<0.000000e+00> : vector<16x8xf32>
    %68 = tpu.matmul %66, %67, %cst_32 {dimension_numbers = #tpu.dot_dimension_numbers<[1], [0], [0], [1], [0, 0, 1, 1], [], []>} : vector<16x8xf32>, vector<8x8xf32>, vector<16x8xf32> -> vector<16x8xf32>
    %cst_33 = arith.constant 0.000000e+00 : f32
    %69 = vector.broadcast %cst_33 : f32 to vector<16x8xf32>
    %70 = arith.maximumf %68, %69 : vector<16x8xf32>
    %c0_34 = arith.constant 0 : index
    %c0_35 = arith.constant 0 : index
    %71 = vector.load %arg10[%c0_34, %c0_35] : memref<16x8xf32, #tpu.memory_space<vmem>>, vector<16x8xf32>
    tpu.vector_store %arg10[%c0_34, %c0_35], %70 {strides = array<i32>} : memref<16x8xf32, #tpu.memory_space<vmem>>, vector<16x8xf32>,
    %cst_36 = arith.constant dense<0.000000e+00> : vector<4x4xf32>
    %72 = tpu.matmul %1, %1, %cst_36 {dimension_numbers = #tpu.dot_dimension_numbers<[1], [1], [0], [0], [0, 0, 1, 0], [], []>} : vector<4x8xf32>, vector<4x8xf32>, vector<4x4xf32> -> vector<4x4xf32>
    %73 = tpu.iota {dimensions = array<i32: 0>} : vector<4x4xi32>
    %74 = tpu.iota {dimensions = array<i32: 1>} : vector<4x4xi32>
    %75 = arith.cmpi eq, %73, %74 : vector<4x4xi32>
    %76 = arith.extui %75 : vector<4x4xi1> to vector<4x4xi32>
    %77 = arith.sitofp %76 : vector<4x4xi32> to vector<4x4xf32>
    %c0_37 = arith.constant 0 : index
    %c0_38 = arith.constant 0 : index
    %78 = memref.load %arg7[%c0_37, %c0_38] : memref<1x1xf32, #tpu.memory_space<smem>>
    %79 = vector.broadcast %78 : f32 to vector<4x4xf32>
    %80 = arith.mulf %79, %77 : vector<4x4xf32>
    %81 = arith.subf %72, %80 : vector<4x4xf32>
    %82 = arith.mulf %81, %81 : vector<4x4xf32>
    %83 = vector.shape_cast %82 : vector<4x4xf32> to vector<1x4x4xf32>
    %cst_39 = arith.constant dense<0.000000e+00> : vector<1xf32>
    %84 = vector.multi_reduction <add>, %83, %cst_39 [1, 2] : vector<1x4x4xf32> to vector<1xf32>
    %85 = vector.shape_cast %84 : vector<1xf32> to vector<1x1x1xf32>
    %86 = vector.extract %85[0, 0, 0] : f32 from vector<1x1x1xf32>
    %87 = vector.broadcast %86 : f32 to vector<1x1xf32>
    %88 = math.sqrt %87 : vector<1x1xf32>
    %c0_40 = arith.constant 0 : index
    %c0_41 = arith.constant 0 : index
    %89 = vector.load %arg12[%c0_40, %c0_41] : memref<1x1xf32, #tpu.memory_space<vmem>>, vector<1x1xf32>
    tpu.vector_store %arg12[%c0_40, %c0_41], %88 {strides = array<i32>} : memref<1x1xf32, #tpu.memory_space<vmem>>, vector<1x1xf32>,
    return
  }
  func.func @transform_0(%arg0: i32) -> (i32, i32) {
    %c0_i32 = arith.constant 0 : i32
    %c0_i32_0 = arith.constant 0 : i32
    %c0_i32_1 = arith.constant 0 : i32
    return %c0_i32, %c0_i32_0 : i32, i32
  }
  func.func @transform_1(%arg0: i32) -> (i32, i32) {
    %c0_i32 = arith.constant 0 : i32
    %c0_i32_0 = arith.constant 0 : i32
    %c0_i32_1 = arith.constant 0 : i32
    return %c0_i32, %c0_i32_0 : i32, i32
  }
  func.func @transform_2(%arg0: i32) -> (i32, i32) {
    %c0_i32 = arith.constant 0 : i32
    %c0_i32_0 = arith.constant 0 : i32
    %c0_i32_1 = arith.constant 0 : i32
    return %c0_i32, %c0_i32_0 : i32, i32
  }
  func.func @transform_3(%arg0: i32) -> (i32, i32) {
    %c0_i32 = arith.constant 0 : i32
    %c0_i32_0 = arith.constant 0 : i32
    %c0_i32_1 = arith.constant 0 : i32
    return %c0_i32, %c0_i32_0 : i32, i32
  }
  func.func @transform_4(%arg0: i32) -> (i32, i32) {
    %c0_i32 = arith.constant 0 : i32
    %c0_i32_0 = arith.constant 0 : i32
    %c0_i32_1 = arith.constant 0 : i32
    return %c0_i32, %c0_i32_0 : i32, i32
  }
  func.func @transform_5(%arg0: i32) -> (i32, i32) {
    %c0_i32 = arith.constant 0 : i32
    %c0_i32_0 = arith.constant 0 : i32
    %c0_i32_1 = arith.constant 0 : i32
    return %c0_i32, %c0_i32_0 : i32, i32
  }
  func.func @transform_6(%arg0: i32) -> (i32, i32) {
    %c0_i32 = arith.constant 0 : i32
    %c0_i32_0 = arith.constant 0 : i32
    %c0_i32_1 = arith.constant 0 : i32
    return %c0_i32, %c0_i32_0 : i32, i32
  }
  func.func @transform_7(%arg0: i32) -> (i32, i32) {
    %c0_i32 = arith.constant 0 : i32
    %c0_i32_0 = arith.constant 0 : i32
    %c0_i32_1 = arith.constant 0 : i32
    return %c0_i32, %c0_i32_0 : i32, i32
  }
  func.func @transform_8(%arg0: i32) -> (i32, i32) {
    %c0_i32 = arith.constant 0 : i32
    %c0_i32_0 = arith.constant 0 : i32
    %c0_i32_1 = arith.constant 0 : i32
    return %c0_i32, %c0_i32_0 : i32, i32
  }
  func.func @transform_9(%arg0: i32) -> (i32, i32) {
    %c0_i32 = arith.constant 0 : i32
    %c0_i32_0 = arith.constant 0 : i32
    %c0_i32_1 = arith.constant 0 : i32
    return %c0_i32, %c0_i32_0 : i32, i32
  }
  func.func @transform_10(%arg0: i32) -> (i32, i32) {
    %c0_i32 = arith.constant 0 : i32
    %c0_i32_0 = arith.constant 0 : i32
    %c0_i32_1 = arith.constant 0 : i32
    return %c0_i32, %c0_i32_0 : i32, i32
  }
  func.func @transform_11(%arg0: i32) -> (i32, i32) {
    %c0_i32 = arith.constant 0 : i32
    %c0_i32_0 = arith.constant 0 : i32
    %c0_i32_1 = arith.constant 0 : i32
    return %c0_i32, %c0_i32_0 : i32, i32
  }
}

</mosaic_0001>

<llo_original>
// kernel: tpu_custom_call.1
$region0: #{tpu_custom_call.1}
  #allocation0 [shape = 'u32[]', space=smem, size = 0x4, offset = 0x4, fixed_abs, tag = 'smem constant byte address 0x4 - core index']
  #allocation1 [shape = 'u32[144,128]{1,0:T(1,128)}', space=vmem, size = 0x12000, scoped, tag = 'internal scratch']
  #allocation2 [shape = 'f32[1,1]{1,0:T(1,128)S(6)}', space=smem, size = 0x200, scoped, tag = 'scoped memory for tpu_custom_call.1']
  #allocation3 [shape = 'f32[1,1]{1,0:T(1,128)S(6)}', space=smem, size = 0x200, scoped, tag = 'scoped memory for tpu_custom_call.1']
  %s0 = inlined_call_operand.vmem [shape: f32[16,8], index: 0, kind: input, shape index: {}]
  %s1 = inlined_call_operand.vmem [shape: f32[4,8], index: 1, kind: input, shape index: {}]
  %s2 = inlined_call_operand.vmem [shape: f32[1,4], index: 2, kind: input, shape index: {}]
  %s3 = inlined_call_operand.<no memory space> [shape: f32[1,1], index: 3, kind: input, shape index: {}]
  %s4 = inlined_call_operand.vmem [shape: f32[16,8], index: 4, kind: input, shape index: {}]
  %s5 = inlined_call_operand.vmem [shape: f32[8,8], index: 5, kind: input, shape index: {}]
  %s6 = inlined_call_operand.<no memory space> [shape: f32[1,1], index: 6, kind: input, shape index: {}]
  %s7 = inlined_call_operand.vmem [shape: f32[2,16], index: 7, kind: input, shape index: {}]
  %s8 = inlined_call_operand.hbm [shape: f32[1,16], index: 8, kind: output, shape index: {0}]
  %s9 = inlined_call_operand.vmem [shape: f32[16,8], index: 9, kind: output, shape index: {1}]
  %s10 = inlined_call_operand.hbm [shape: f32[1,1], index: 10, kind: output, shape index: {2}]
  %s11 = inlined_call_operand.hbm [shape: f32[1,1], index: 11, kind: output, shape index: {3}]
  %12 = xla_tuple %s8, %s9, %s10, %s11
  %s13 = sld [smem:[#allocation0]]
  $region66: #{tpu_custom_call.1} parent=0
    _
  %s15 = ssub.s32 1, %s13
  %s16 = scalar_select 0, %s15, %s13
  %17 = sst [smem:[#allocation2]] %s3
  %18 = sst [smem:[#allocation3]] %s6
  $region1: #{tpu_custom_call.1} parent=0
    #allocation4 [shape = 'u8[512]{0}', space=vmem, size = 0x400, scoped, tag = 'output window, operand 0, single buffered']
    #allocation5 [shape = 's32[1]{0}', space=sflag, size = 0x4, scoped, tag = 'scoped memory for tpu_custom_call.1']
    #allocation6 [shape = 'u8[512]{0}', space=vmem, size = 0x400, scoped, tag = 'output window, operand 2, single buffered']
    #allocation7 [shape = 's32[1]{0}', space=sflag, size = 0x4, scoped, tag = 'scoped memory for tpu_custom_call.1']
    #allocation8 [shape = 'u8[512]{0}', space=vmem, size = 0x400, scoped, tag = 'output window, operand 3, single buffered']
    %19 = vsyncpa [#allocation5], 0
    %20 = vsyncpa [#allocation7], 0
    // Predicated region
    $region2: #{tpu_custom_call.1} parent=1 // pred_check
      _
    $region3: #{tpu_custom_call.1} parent=1 // pred_check_branch
      %22 = sbr.rel (0) target = $region5
    $region4: #{tpu_custom_call.1} parent=1 // pred_region
      _
    $region5: #{tpu_custom_call.1} parent=1 // pred_fallthru
      _
    // Predicated region
    $region6: #{tpu_custom_call.1} parent=1 // pred_check
      _
    $region7: #{tpu_custom_call.1} parent=1 // pred_check_branch
      %24 = sbr.rel (0) target = $region9
    $region8: #{tpu_custom_call.1} parent=1 // pred_region
      _
    $region9: #{tpu_custom_call.1} parent=1 // pred_fallthru
      _
    // Predicated region
    $region10: #{tpu_custom_call.1} parent=1 // pred_check
      _
    $region11: #{tpu_custom_call.1} parent=1 // pred_check_branch
      %26 = sbr.rel (0) target = $region13
    $region12: #{tpu_custom_call.1} parent=1 // pred_region
      _
    $region13: #{tpu_custom_call.1} parent=1 // pred_fallthru
      _
    // Predicated region
    $region14: #{tpu_custom_call.1} parent=1 // pred_check
      _
    $region15: #{tpu_custom_call.1} parent=1 // pred_check_branch
      %28 = sbr.rel (0) target = $region17
    $region16: #{tpu_custom_call.1} parent=1 // pred_region
      _
    $region17: #{tpu_custom_call.1} parent=1 // pred_fallthru
      _
    // Predicated region
    $region18: #{tpu_custom_call.1} parent=1 // pred_check
      _
    $region19: #{tpu_custom_call.1} parent=1 // pred_check_branch
      %30 = sbr.rel (0) target = $region21
    $region20: #{tpu_custom_call.1} parent=1 // pred_region
      _
    $region21: #{tpu_custom_call.1} parent=1 // pred_fallthru
      _
    // Predicated region
    $region22: #{tpu_custom_call.1} parent=1 // pred_check
      _
    $region23: #{tpu_custom_call.1} parent=1 // pred_check_branch
      %32 = sbr.rel (0) target = $region25
    $region24: #{tpu_custom_call.1} parent=1 // pred_region
      _
    $region25: #{tpu_custom_call.1} parent=1 // pred_fallthru
      _
    // Predicated region
    $region26: #{tpu_custom_call.1} parent=1 // pred_check
      _
    $region27: #{tpu_custom_call.1} parent=1 // pred_check_branch
      %34 = sbr.rel (0) target = $region29
    $region28: #{tpu_custom_call.1} parent=1 // pred_region
      _
    $region29: #{tpu_custom_call.1} parent=1 // pred_fallthru
      _
    // Predicated region
    $region30: #{tpu_custom_call.1} parent=1 // pred_check
      _
    $region31: #{tpu_custom_call.1} parent=1 // pred_check_branch
      %36 = sbr.rel (0) target = $region33
    $region32: #{tpu_custom_call.1} parent=1 // pred_region
      _
    $region33: #{tpu_custom_call.1} parent=1 // pred_fallthru
      _
    %v37 = vld [vmem:[%s0] sm:$0xff]
    %v38 = vld [vmem:[%s0 + $0x8] sm:$0xff]
    %v39 = vld [vmem:[%s1] sm:$0xf]
    %v40 = vmul.f32 %v37, %v37
    %v41 = vmul.f32 %v38, %v38
    %vm42 = vcmask 64512
    %v43 = vsel %vm42, %v40, 0.0
    %44 = vadd.xlane.f32.xlu0 %v43
    %v45 = vpop.xlane.xlu0 %44
    %v46 = vsel %vm42, %v41, 0.0
    %47 = vadd.xlane.f32.xlu0 %v46
    %v48 = vpop.xlane.xlu0 %47
    %v49 = vrsqrt.pop %v45
    %v50 = vmul.f32 %v45, %v49
    %vm51 = vcmp.eq.f32.partialorder %v45, inf
    %v52 = vsel %vm51, %v45, %v50
    %vm53 = vcmp.eq.f32.partialorder %v45, 0.0
    %v54 = vand.u32 %v45, 2147483648
    %v55 = vsel %vm53, %v54, %v52
    %v56 = vrsqrt.pop %v48
    %v57 = vmul.f32 %v48, %v56
    %vm58 = vcmp.eq.f32.partialorder %v48, inf
    %v59 = vsel %vm58, %v48, %v57
    %vm60 = vcmp.eq.f32.partialorder %v48, 0.0
    %v61 = vand.u32 %v48, 2147483648
    %v62 = vsel %vm60, %v61, %v59
    %v63 = vmul.f32 %v39, %v39
    %vm64 = vcmask 60416
    %v65 = vsel %vm64, %v63, 0.0
    %66 = vadd.xlane.f32.xlu0 %v65
    %v67 = vpop.xlane.xlu0 %66
    %v68 = vrsqrt.pop %v67
    %v69 = vmul.f32 %v67, %v68
    %vm70 = vcmp.eq.f32.partialorder %v67, inf
    %v71 = vsel %vm70, %v67, %v69
    %vm72 = vcmp.eq.f32.partialorder %v67, 0.0
    %v73 = vand.u32 %v67, 2147483648
    %v74 = vsel %vm72, %v73, %v71
    %v75 = vadd.f32 %v55, 1e-08
    %v76 = vadd.f32 %v62, 1e-08
    %v77 = vrcp.pop %v75
    %v78 = vmul.f32 %v37, %v77
    %v79 = vrcp.pop %v76
    %v80 = vmul.f32 %v38, %v79
    %v81 = vadd.f32 %v74, 1e-08
    %v82 = vrcp.pop %v81
    %v83 = vmul.f32 %v39, %v82
    %v85 = vsel %vm42, %v83, 0
    %v88 = vsel %vm42, %v78, 0
    %v91 = vsel %vm42, %v80, 0
    %93 = vmatprep.subr.mxu0 0.0
    %94 = vmatpush1.xpose.msra.mxu0 %v88
    %95 = vmatprep.subr.mxu0 0.0
    %96 = vmatpush1.xpose.msra.mxu0 %v91
    %97 = vmatprep.subr.mxu0 0.0
    %98 = vmatpush1.xpose.msra.mxu0 0.0
    %99 = vmatprep.subr.mxu0 0.0
    %100 = vmatpush1.xpose.msra.mxu0 0.0
    %101 = vmatprep.subr.mxu0 0.0
    %102 = vmatpush1.xpose.msra.mxu0 0.0
    %103 = vmatprep.subr.mxu0 0.0
    %104 = vmatpush1.xpose.msra.mxu0 0.0
    %105 = vmatprep.subr.mxu0 0.0
    %106 = vmatpush1.xpose.msra.mxu0 0.0
    %107 = vmatprep.subr.mxu0 0.0
    %108 = vmatpush1.xpose.msra.mxu0 0.0
    %109 = vmatprep.subr.mxu0 0.0
    %110 = vmatpush1.xpose.msra.mxu0 0.0
    %111 = vmatprep.subr.mxu0 0.0
    %112 = vmatpush1.xpose.msra.mxu0 0.0
    %113 = vmatprep.subr.mxu0 0.0
    %114 = vmatpush1.xpose.msra.mxu0 0.0
    %115 = vmatprep.subr.mxu0 0.0
    %116 = vmatpush1.xpose.msra.mxu0 0.0
    %117 = vmatprep.subr.mxu0 0.0
    %118 = vmatpush1.xpose.msra.mxu0 0.0
    %119 = vmatprep.subr.mxu0 0.0
    %120 = vmatpush1.xpose.msra.mxu0 0.0
    %121 = vmatprep.subr.mxu0 0.0
    %122 = vmatpush1.xpose.msra.mxu0 0.0
    %123 = vmatprep.subr.mxu0 0.0
    %124 = vmatpush1.xpose.msra.mxu0 0.0
    %125 = vmatprep.subr.mxu0 0.0
    %126 = vmatpush1.xpose.msra.mxu0 0.0
    %127 = vmatprep.subr.mxu0 0.0
    %128 = vmatpush1.xpose.msra.mxu0 0.0
    %129 = vmatprep.subr.mxu0 0.0
    %130 = vmatpush1.xpose.msra.mxu0 0.0
    %131 = vmatprep.subr.mxu0 0.0
    %132 = vmatpush1.xpose.msra.mxu0 0.0
    %133 = vmatprep.subr.mxu0 0.0
    %134 = vmatpush1.xpose.msra.mxu0 0.0
    %135 = vmatprep.subr.mxu0 0.0
    %136 = vmatpush1.xpose.msra.mxu0 0.0
    %137 = vmatprep.subr.mxu0 0.0
    %138 = vmatpush1.xpose.msra.mxu0 0.0
    %139 = vmatprep.subr.mxu0 0.0
    %140 = vmatpush1.xpose.msra.mxu0 0.0
    %141 = vmatprep.subr.mxu0 0.0
    %142 = vmatpush1.xpose.msra.mxu0 0.0
    %143 = vmatprep.subr.mxu0 0.0
    %144 = vmatpush1.xpose.msra.mxu0 0.0
    %145 = vmatprep.subr.mxu0 0.0
    %146 = vmatpush1.xpose.msra.mxu0 0.0
    %147 = vmatprep.subr.mxu0 0.0
    %148 = vmatpush1.xpose.msra.mxu0 0.0
    %149 = vmatprep.subr.mxu0 0.0
    %150 = vmatpush1.xpose.msra.mxu0 0.0
    %151 = vmatprep.subr.mxu0 0.0
    %152 = vmatpush1.xpose.msra.mxu0 0.0
    %153 = vmatprep.subr.mxu0 0.0
    %154 = vmatpush1.xpose.msra.mxu0 0.0
    %155 = vmatprep.subr.mxu0 0.0
    %156 = vmatpush1.xpose.msra.mxu0 0.0
    %157 = vmatprep.mubr.f32.mxu0 0.0
    %158 = vmatmul.mubr.f32.gmra.mrb[0].mxu0 %v85
    %v159 = vpop.f32.mrb[0].mxu0
    %v160 = vadd.f32 0.0, %v159
    %v161 = vpop.f32.mrb[0].mxu0
    %162 = vdwg.mxu0
    %v163 = vld [vmem:[%s2] sm:$0x1]
    %s164 = sld [smem:[#allocation2]]
    %v165 = vstv %s164
    %vm166 = vcmask 31744
    %v168 = vsel %vm166, %v163, 0
    %vm170 = vcmask 1043456
    %v172 = vsel %vm170, %v160, 0
    %174 = vmatprep.subr.mxu0 0.0
    %175 = vmatpush1.msra.mxu0 %v172
    %176 = vmatprep.subr.mxu0 0.0
    %177 = vmatpush1.msra.mxu0 0.0
    %178 = vmatprep.subr.mxu0 0.0
    %179 = vmatpush1.msra.mxu0 0.0
    %180 = vmatprep.subr.mxu0 0.0
    %181 = vmatpush1.msra.mxu0 0.0
    %182 = vmatprep.subr.mxu0 0.0
    %183 = vmatpush1.msra.mxu0 0.0
    %184 = vmatprep.subr.mxu0 0.0
    %185 = vmatpush1.msra.mxu0 0.0
    %186 = vmatprep.subr.mxu0 0.0
    %187 = vmatpush1.msra.mxu0 0.0
    %188 = vmatprep.subr.mxu0 0.0
    %189 = vmatpush1.msra.mxu0 0.0
    %190 = vmatprep.subr.mxu0 0.0
    %191 = vmatpush1.msra.mxu0 0.0
    %192 = vmatprep.subr.mxu0 0.0
    %193 = vmatpush1.msra.mxu0 0.0
    %194 = vmatprep.subr.mxu0 0.0
    %195 = vmatpush1.msra.mxu0 0.0
    %196 = vmatprep.subr.mxu0 0.0
    %197 = vmatpush1.msra.mxu0 0.0
    %198 = vmatprep.subr.mxu0 0.0
    %199 = vmatpush1.msra.mxu0 0.0
    %200 = vmatprep.subr.mxu0 0.0
    %201 = vmatpush1.msra.mxu0 0.0
    %202 = vmatprep.subr.mxu0 0.0
    %203 = vmatpush1.msra.mxu0 0.0
    %204 = vmatprep.subr.mxu0 0.0
    %205 = vmatpush1.msra.mxu0 0.0
    %206 = vmatprep.subr.mxu0 0.0
    %207 = vmatpush1.msra.mxu0 0.0
    %208 = vmatprep.subr.mxu0 0.0
    %209 = vmatpush1.msra.mxu0 0.0
    %210 = vmatprep.subr.mxu0 0.0
    %211 = vmatpush1.msra.mxu0 0.0
    %212 = vmatprep.subr.mxu0 0.0
    %213 = vmatpush1.msra.mxu0 0.0
    %214 = vmatprep.subr.mxu0 0.0
    %215 = vmatpush1.msra.mxu0 0.0
    %216 = vmatprep.subr.mxu0 0.0
    %217 = vmatpush1.msra.mxu0 0.0
    %218 = vmatprep.subr.mxu0 0.0
    %219 = vmatpush1.msra.mxu0 0.0
    %220 = vmatprep.subr.mxu0 0.0
    %221 = vmatpush1.msra.mxu0 0.0
    %222 = vmatprep.subr.mxu0 0.0
    %223 = vmatpush1.msra.mxu0 0.0
    %224 = vmatprep.subr.mxu0 0.0
    %225 = vmatpush1.msra.mxu0 0.0
    %226 = vmatprep.subr.mxu0 0.0
    %227 = vmatpush1.msra.mxu0 0.0
    %228 = vmatprep.subr.mxu0 0.0
    %229 = vmatpush1.msra.mxu0 0.0
    %230 = vmatprep.subr.mxu0 0.0
    %231 = vmatpush1.msra.mxu0 0.0
    %232 = vmatprep.subr.mxu0 0.0
    %233 = vmatpush1.msra.mxu0 0.0
    %234 = vmatprep.subr.mxu0 0.0
    %235 = vmatpush1.msra.mxu0 0.0
    %236 = vmatprep.subr.mxu0 0.0
    %237 = vmatpush1.msra.mxu0 0.0
    %238 = vmatprep.mubr.f32.mxu0 0.0
    %239 = vmatmul.mubr.f32.gmra.mrb[0].mxu0 %v168
    %v240 = vpop.f32.mrb[0].mxu0
    %v241 = vadd.f32 %v165, %v240
    %v242 = vpop.f32.mrb[0].mxu0
    %243 = vdwg.mxu0
    %v244 = vxor.u32 %v241, 2147483648
    %v245 = vmul.f32 %v244, 1.442695
    %v246 = vpow.pop %v245
    %v247 = vadd.f32 %v246, 1.0
    %v248 = vrcp.pop %v247
    %v249 = vmul.f32 1.0, %v248
    %vm250 = vcmask 122880
    %v251 = vsel %vm250, %v249, 0.0
    %252 = vadd.xlane.f32.xlu0 %v251
    %v253 = vpop.xlane.xlu0 %252
    %v254 = vrot.slane %v253, 4
    %v255 = vadd.f32 %v253, %v254
    %v256 = vrot.slane %v255, 2
    %v257 = vadd.f32 %v255, %v256
    %v258 = vrot.slane %v257, 1
    %v259 = vadd.f32 %v257, %v258
    %s260 = vtos %v259
    %v261 = vstv %s260
    %v262 = vmul.f32 %v261, 0.0625
    %v263 = vmax.f32 %v262, 1e-06
    %v264 = vmin.f32 %v263, 0.999999
    %v265 = vrcp.pop 0.5
    %v266 = vmul.f32 %v264, %v265
    %v267 = vlog2.pop %v266
    %v268 = vmul.f32 %v267, 0.6931472
    %v269 = vmul.f32 %v264, %v268
    %v270 = vsub.f32 1.0, %v264
    %v271 = vmul.f32 %v270, %v265
    %v272 = vlog2.pop %v271
    %v273 = vmul.f32 %v272, 0.6931472
    %v274 = vmul.f32 %v270, %v273
    %v275 = vadd.f32 %v269, %v274
    %vm276 = vcmask 0
    %277 = vst.msk [vmem:[#allocation6] sm:$0x1] %vm276, %v275
    %v278 = vld [vmem:[%s7] sm:$0x3]
    %v279 = vadd.f32 %v249, %v278
    %v280 = vsub.f32 1.0, %v249
    %v282 = vrot.slane %v278, 1
    %v284 = vadd.f32 %v280, %v282
    %vm285 = vcmp.ge.f32.partialorder %v279, %v284
    %v286 = vsel %vm285, 1, 0
    %v287 = vcvt.s32.f32 %v286
    %288 = vst.msk [vmem:[#allocation4] sm:$0x1] %vm250, %v287
    %v289 = vld [vmem:[%s4] sm:$0xff]
    %v290 = vld [vmem:[%s4 + $0x8] sm:$0xff]
    %v291 = vadd.f32 %v37, %v289
    %v292 = vadd.f32 %v38, %v290
    %v293 = vld [vmem:[%s5] sm:$0xff]
    %v295 = vsel %vm42, %v291, 0
    %v298 = vsel %vm42, %v292, 0
    %300 = vmatprep.subr.mxu0 0.0
    %301 = vmatpush1.msra.mxu0 %v293
    %302 = vmatprep.subr.mxu0 0.0
    %303 = vmatpush1.msra.mxu0 0.0
    %304 = vmatprep.subr.mxu0 0.0
    %305 = vmatpush1.msra.mxu0 0.0
    %306 = vmatprep.subr.mxu0 0.0
    %307 = vmatpush1.msra.mxu0 0.0
    %308 = vmatprep.subr.mxu0 0.0
    %309 = vmatpush1.msra.mxu0 0.0
    %310 = vmatprep.subr.mxu0 0.0
    %311 = vmatpush1.msra.mxu0 0.0
    %312 = vmatprep.subr.mxu0 0.0
    %313 = vmatpush1.msra.mxu0 0.0
    %314 = vmatprep.subr.mxu0 0.0
    %315 = vmatpush1.msra.mxu0 0.0
    %316 = vmatprep.subr.mxu0 0.0
    %317 = vmatpush1.msra.mxu0 0.0
    %318 = vmatprep.subr.mxu0 0.0
    %319 = vmatpush1.msra.mxu0 0.0
    %320 = vmatprep.subr.mxu0 0.0
    %321 = vmatpush1.msra.mxu0 0.0
    %322 = vmatprep.subr.mxu0 0.0
    %323 = vmatpush1.msra.mxu0 0.0
    %324 = vmatprep.subr.mxu0 0.0
    %325 = vmatpush1.msra.mxu0 0.0
    %326 = vmatprep.subr.mxu0 0.0
    %327 = vmatpush1.msra.mxu0 0.0
    %328 = vmatprep.subr.mxu0 0.0
    %329 = vmatpush1.msra.mxu0 0.0
    %330 = vmatprep.subr.mxu0 0.0
    %331 = vmatpush1.msra.mxu0 0.0
    %332 = vmatprep.subr.mxu0 0.0
    %333 = vmatpush1.msra.mxu0 0.0
    %334 = vmatprep.subr.mxu0 0.0
    %335 = vmatpush1.msra.mxu0 0.0
    %336 = vmatprep.subr.mxu0 0.0
    %337 = vmatpush1.msra.mxu0 0.0
    %338 = vmatprep.subr.mxu0 0.0
    %339 = vmatpush1.msra.mxu0 0.0
    %340 = vmatprep.subr.mxu0 0.0
    %341 = vmatpush1.msra.mxu0 0.0
    %342 = vmatprep.subr.mxu0 0.0
    %343 = vmatpush1.msra.mxu0 0.0
    %344 = vmatprep.subr.mxu0 0.0
    %345 = vmatpush1.msra.mxu0 0.0
    %346 = vmatprep.subr.mxu0 0.0
    %347 = vmatpush1.msra.mxu0 0.0
    %348 = vmatprep.subr.mxu0 0.0
    %349 = vmatpush1.msra.mxu0 0.0
    %350 = vmatprep.subr.mxu0 0.0
    %351 = vmatpush1.msra.mxu0 0.0
    %352 = vmatprep.subr.mxu0 0.0
    %353 = vmatpush1.msra.mxu0 0.0
    %354 = vmatprep.subr.mxu0 0.0
    %355 = vmatpush1.msra.mxu0 0.0
    %356 = vmatprep.subr.mxu0 0.0
    %357 = vmatpush1.msra.mxu0 0.0
    %358 = vmatprep.subr.mxu0 0.0
    %359 = vmatpush1.msra.mxu0 0.0
    %360 = vmatprep.subr.mxu0 0.0
    %361 = vmatpush1.msra.mxu0 0.0
    %362 = vmatprep.subr.mxu0 0.0
    %363 = vmatpush1.msra.mxu0 0.0
    %364 = vmatprep.mubr.f32.mxu0 0.0
    %365 = vmatmul.mubr.f32.gmra.mrb[0].mxu0 %v295
    %v366 = vpop.f32.mrb[0].mxu0
    %v367 = vadd.f32 0.0, %v366
    %v368 = vpop.f32.mrb[0].mxu0
    %369 = vmatprep.mubr.f32.mxu0 0.0
    %370 = vmatmul.mubr.f32.gmra.mrb[0].mxu0 %v298
    %v371 = vpop.f32.mrb[0].mxu0
    %v372 = vadd.f32 0.0, %v371
    %v373 = vpop.f32.mrb[0].mxu0
    %374 = vdwg.mxu0
    %v375 = vmax.f32 %v367, 0.0
    %v376 = vmax.f32 %v372, 0.0
    %377 = vst.msk [vmem:[%s9] sm:$0xff] %vm42, %v375
    %378 = vst.msk [vmem:[%s9 + $0x8] sm:$0xff] %vm42, %v376
    %v380 = vsel %vm42, %v39, 0
    %382 = vmatprep.subr.mxu0 0.0
    %383 = vmatpush1.xpose.msra.mxu0 %v380
    %384 = vmatprep.subr.mxu0 0.0
    %385 = vmatpush1.xpose.msra.mxu0 0.0
    %386 = vmatprep.subr.mxu0 0.0
    %387 = vmatpush1.xpose.msra.mxu0 0.0
    %388 = vmatprep.subr.mxu0 0.0
    %389 = vmatpush1.xpose.msra.mxu0 0.0
    %390 = vmatprep.subr.mxu0 0.0
    %391 = vmatpush1.xpose.msra.mxu0 0.0
    %392 = vmatprep.subr.mxu0 0.0
    %393 = vmatpush1.xpose.msra.mxu0 0.0
    %394 = vmatprep.subr.mxu0 0.0
    %395 = vmatpush1.xpose.msra.mxu0 0.0
    %396 = vmatprep.subr.mxu0 0.0
    %397 = vmatpush1.xpose.msra.mxu0 0.0
    %398 = vmatprep.subr.mxu0 0.0
    %399 = vmatpush1.xpose.msra.mxu0 0.0
    %400 = vmatprep.subr.mxu0 0.0
    %401 = vmatpush1.xpose.msra.mxu0 0.0
    %402 = vmatprep.subr.mxu0 0.0
    %403 = vmatpush1.xpose.msra.mxu0 0.0
    %404 = vmatprep.subr.mxu0 0.0
    %405 = vmatpush1.xpose.msra.mxu0 0.0
    %406 = vmatprep.subr.mxu0 0.0
    %407 = vmatpush1.xpose.msra.mxu0 0.0
    %408 = vmatprep.subr.mxu0 0.0
    %409 = vmatpush1.xpose.msra.mxu0 0.0
    %410 = vmatprep.subr.mxu0 0.0
    %411 = vmatpush1.xpose.msra.mxu0 0.0
    %412 = vmatprep.subr.mxu0 0.0
    %413 = vmatpush1.xpose.msra.mxu0 0.0
    %414 = vmatprep.subr.mxu0 0.0
    %415 = vmatpush1.xpose.msra.mxu0 0.0
    %416 = vmatprep.subr.mxu0 0.0
    %417 = vmatpush1.xpose.msra.mxu0 0.0
    %418 = vmatprep.subr.mxu0 0.0
    %419 = vmatpush1.xpose.msra.mxu0 0.0
    %420 = vmatprep.subr.mxu0 0.0
    %421 = vmatpush1.xpose.msra.mxu0 0.0
    %422 = vmatprep.subr.mxu0 0.0
    %423 = vmatpush1.xpose.msra.mxu0 0.0
    %424 = vmatprep.subr.mxu0 0.0
    %425 = vmatpush1.xpose.msra.mxu0 0.0
    %426 = vmatprep.subr.mxu0 0.0
    %427 = vmatpush1.xpose.msra.mxu0 0.0
    %428 = vmatprep.subr.mxu0 0.0
    %429 = vmatpush1.xpose.msra.mxu0 0.0
    %430 = vmatprep.subr.mxu0 0.0
    %431 = vmatpush1.xpose.msra.mxu0 0.0
    %432 = vmatprep.subr.mxu0 0.0
    %433 = vmatpush1.xpose.msra.mxu0 0.0
    %434 = vmatprep.subr.mxu0 0.0
    %435 = vmatpush1.xpose.msra.mxu0 0.0
    %436 = vmatprep.subr.mxu0 0.0
    %437 = vmatpush1.xpose.msra.mxu0 0.0
    %438 = vmatprep.subr.mxu0 0.0
    %439 = vmatpush1.xpose.msra.mxu0 0.0
    %440 = vmatprep.subr.mxu0 0.0
    %441 = vmatpush1.xpose.msra.mxu0 0.0
    %442 = vmatprep.subr.mxu0 0.0
    %443 = vmatpush1.xpose.msra.mxu0 0.0
    %444 = vmatprep.subr.mxu0 0.0
    %445 = vmatpush1.xpose.msra.mxu0 0.0
    %446 = vmatprep.mubr.f32.mxu0 0.0
    %447 = vmatmul.mubr.f32.gmra.mrb[0].mxu0 %v380
    %v448 = vpop.f32.mrb[0].mxu0
    %v449 = vadd.f32 0.0, %v448
    %v450 = vpop.f32.mrb[0].mxu0
    %451 = vdwg.mxu0
    %v452 = vlaneseq
    %v453 = vshrl.u32 %v452, 7
    %v454 = vlaneseq
    %v455 = vand.u32 %v454, 127
    %vm456 = vcmp.eq.s32.totalorder %v453, %v455
    %v457 = vsel %vm456, 1, 0
    %v458 = vcvt.s32.f32 %v457
    %s459 = sld [smem:[#allocation3]]
    %v460 = vstv %s459
    %v461 = vmul.f32 %v460, %v458
    %v462 = vsub.f32 %v449, %v461
    %v463 = vmul.f32 %v462, %v462
    %vm464 = vcmask 27648
    %v465 = vsel %vm464, %v463, 0.0
    %466 = vadd.xlane.f32.xlu0 %v465
    %v467 = vpop.xlane.xlu0 %466
    %v468 = vrot.slane %v467, 4
    %v469 = vadd.f32 %v467, %v468
    %v470 = vrot.slane %v469, 2
    %v471 = vadd.f32 %v469, %v470
    %v472 = vrot.slane %v471, 1
    %v473 = vadd.f32 %v471, %v472
    %s474 = vtos %v473
    %v475 = vstv %s474
    %v476 = vrsqrt.pop %v475
    %v477 = vmul.f32 %v475, %v476
    %vm478 = vcmp.eq.f32.partialorder %v475, inf
    %v479 = vsel %vm478, %v475, %v477
    %vm480 = vcmp.eq.f32.partialorder %v475, 0.0
    %v481 = vand.u32 %v475, 2147483648
    %v482 = vsel %vm480, %v481, %v479
    %483 = vst.msk [vmem:[#allocation8] sm:$0x1] %vm276, %v482
    // Predicated region
    $region34: #{tpu_custom_call.1} parent=1 // pred_check
      _
    $region35: #{tpu_custom_call.1} parent=1 // pred_check_branch
      %485 = sbr.rel (0) target = $region37
    $region36: #{tpu_custom_call.1} parent=1 // pred_region
      %s487 = ssub.s32 16, 16
      %488 = vsyncadd [#allocation5], %s487
      %s490 = sshll.u32 [#allocation4], 4
      %s491 = int_to_ptr.vmem [resolvable:$true] %s490
      %493 = dma.vmem_to_hbm [thread:$0]  %s491, 16, %s8, [#allocation5]
    $region37: #{tpu_custom_call.1} parent=1 // pred_fallthru
      _
    // Predicated region
    $region38: #{tpu_custom_call.1} parent=1 // pred_check
      _
    $region39: #{tpu_custom_call.1} parent=1 // pred_check_branch
      %495 = sbr.rel (0) target = $region41
    $region40: #{tpu_custom_call.1} parent=1 // pred_region
      _
    $region41: #{tpu_custom_call.1} parent=1 // pred_fallthru
      _
    // Predicated region
    $region42: #{tpu_custom_call.1} parent=1 // pred_check
      _
    $region43: #{tpu_custom_call.1} parent=1 // pred_check_branch
      %497 = sbr.rel (0) target = $region45
    $region44: #{tpu_custom_call.1} parent=1 // pred_region
      %s499 = ssub.s32 16, 16
      %500 = vsyncadd [#allocation7], %s499
      %s502 = sshll.u32 [#allocation6], 4
      %s503 = int_to_ptr.vmem [resolvable:$true] %s502
      %505 = dma.vmem_to_hbm [thread:$0]  %s503, 16, %s10, [#allocation7]
    $region45: #{tpu_custom_call.1} parent=1 // pred_fallthru
      _
    // Predicated region
    $region46: #{tpu_custom_call.1} parent=1 // pred_check
      _
    $region47: #{tpu_custom_call.1} parent=1 // pred_check_branch
      %507 = sbr.rel (0) target = $region49
    $region48: #{tpu_custom_call.1} parent=1 // pred_region
      %s509 = ssub.s32 16, 16
      %510 = vsyncadd [#allocation7], %s509
      %s512 = sshll.u32 [#allocation8], 4
      %s513 = int_to_ptr.vmem [resolvable:$true] %s512
      %515 = dma.vmem_to_hbm [thread:$0]  %s513, 16, %s11, [#allocation7]
    $region49: #{tpu_custom_call.1} parent=1 // pred_fallthru
      _
    // Predicated region
    $region50: #{tpu_custom_call.1} parent=1 // pred_check
      _
    $region51: #{tpu_custom_call.1} parent=1 // pred_check_branch
      %517 = sbr.rel (0) target = $region53
    $region52: #{tpu_custom_call.1} parent=1 // pred_region
      %518 = dma.done [#allocation5], 16
    $region53: #{tpu_custom_call.1} parent=1 // pred_fallthru
      _
    // Predicated region
    $region54: #{tpu_custom_call.1} parent=1 // pred_check
      _
    $region55: #{tpu_custom_call.1} parent=1 // pred_check_branch
      %520 = sbr.rel (0) target = $region57
    $region56: #{tpu_custom_call.1} parent=1 // pred_region
      _
    $region57: #{tpu_custom_call.1} parent=1 // pred_fallthru
      _
    // Predicated region
    $region58: #{tpu_custom_call.1} parent=1 // pred_check
      _
    $region59: #{tpu_custom_call.1} parent=1 // pred_check_branch
      %522 = sbr.rel (0) target = $region61
    $region60: #{tpu_custom_call.1} parent=1 // pred_region
      %523 = dma.done [#allocation7], 16
    $region61: #{tpu_custom_call.1} parent=1 // pred_fallthru
      _
    // Predicated region
    $region62: #{tpu_custom_call.1} parent=1 // pred_check
      _
    $region63: #{tpu_custom_call.1} parent=1 // pred_check_branch
      %525 = sbr.rel (0) target = $region65
    $region64: #{tpu_custom_call.1} parent=1 // pred_region
      %526 = dma.done [#allocation7], 16
    $region65: #{tpu_custom_call.1} parent=1 // pred_fallthru
      _
    %527 = vsyncpa [#allocation5], 1
    %528 = vsyncpa [#allocation7], 1

</llo_original>
